<compile_context>
chip_gen: v5e
topology: v5e:2x2
jax: 0.10.0
libtpu: 0.0.40
codegen_flags: <defaults>
</compile_context>

<pallas_src>
import functools

import jax
import jax.numpy as jnp
import numpy as np
from jax.experimental import pallas as pl
from jax.experimental.pallas import tpu as pltpu


# ------------------------------ fused kernel ------------------------------- #

def _fused_basic_block_kernel(xc_ref, w1_ref, b1_ref, w2_ref, w3_ref,
                              w4_ref, b2_ref, mask_ref, o_ref, *, H, W):
    # xc_ref  : (1, Cin, (H+4)*Wc)  zero-padded flat "canvas"; the image sits
    #                               at canvas rows 2..H+1, cols 1..W (Wc=W+2).
    # w1_ref  : (Cout, 9*Cin)       conv1 3x3 im2col weights, bn1 scale folded
    # b1_ref  : (Cout, 1)           bn1 bias
    # w2_ref  : (C2, Cout)          conv2 1x1 weights
    # w3_ref  : (Cout, 4*C2)        conv3 2x2 im2col weights
    # w4_ref  : (Cout, 9*Cout)      conv4 3x3 im2col weights, bn2 scale folded
    # b2_ref  : (Cout, 1)           bn2 bias
    # mask_ref: (1, H*Wc)           1 in the valid interior, 0 on the halo
    #                               columns (canvas cols 0 and W+1)
    # o_ref   : (1, Cout, H*Wc)     NCHW-flat result on the canvas row block
    Wc = W + 2
    Lo = H * Wc               # flat length of the H output rows
    base = 2 * Wc             # flat offset of canvas row 2 (first output row)
    f32 = jnp.float32

    c2 = w2_ref.shape[0]
    cout = o_ref.shape[1]

    xc = xc_ref[0]            # (Cin, (H+4)*Wc)
    mask = mask_ref[...]      # (1, Lo)

    def conv_flat(src, w_mat, kh, kw):
        # src: (C, Lsrc) flat canvas (zeros wherever the conv must read
        # padding).  Tap (dh, dw) is the constant flat shift (dh-1)*Wc+(dw-1);
        # one im2col matmul covers all output positions in canvas rows 2..H+1.
        cin = src.shape[0]
        cols = []
        for dh in range(kh):
            for dw in range(kw):
                start = base + (dh - 1) * Wc + (dw - 1)
                cols.append(src[:, start:start + Lo])
        patches = jnp.concatenate(cols, axis=0)          # (kh*kw*C, Lo)
        return jnp.dot(w_mat, patches, preferred_element_type=f32)

    # conv1 (3x3, pad 1) ; bn1 (scale folded into w1, bias here) ; relu
    y1 = jnp.maximum(conv_flat(xc, w1_ref[...], 3, 3) + b1_ref[...], 0.0)

    # conv2 (1x1).  Mask the halo columns so they act as the zeros that
    # ZeroPad2d((1,0,1,0)) / conv3 expect to read on the left edge.
    y2 = jnp.dot(w2_ref[...], y1, preferred_element_type=f32) * mask

    # ZeroPad2d((1,0,1,0)) + conv3 (2x2, valid) + relu.  The top pad row is
    # supplied by the prepended zero rows; the left pad column is the (masked)
    # col-0 halo of y2.
    c3 = jnp.concatenate([jnp.zeros((c2, base), f32), y2], axis=1)
    y3 = jnp.maximum(conv_flat(c3, w3_ref[...], 2, 2), 0.0) * mask

    # conv4 (3x3, pad 1) ; bn2 ; residual add ; relu
    zrows = jnp.zeros((cout, base), f32)
    c4 = jnp.concatenate([zrows, y3, zrows], axis=1)
    y4 = conv_flat(c4, w4_ref[...], 3, 3) + b2_ref[...]
    y4 = y4 + xc[:, base:base + Lo]                      # identity path
    o_ref[0] = jnp.maximum(y4, 0.0)


# --------------------------- one-time weight prep --------------------------- #

def pack_basic_block_params(w1, w2, w3, w4, g1, be1, m1, v1,
                            g2, be2, m2, v2, eps):
    """Fold inference-mode BN into scale/bias, fold scales into the conv
    weights, and repack conv weights as (Cout, K) im2col matrices
    (tap-major (dh, dw), then input channel)."""
    cout, cin = w1.shape[0], w1.shape[1]
    c2 = w2.shape[0]
    s1 = g1 / jnp.sqrt(v1 + eps)
    b1 = be1 - m1 * s1
    s2 = g2 / jnp.sqrt(v2 + eps)
    b2 = be2 - m2 * s2
    w1m = jnp.transpose(w1, (0, 2, 3, 1)).reshape(cout, 9 * cin) * s1[:, None]
    w2m = w2.reshape(c2, cout)
    w3m = jnp.transpose(w3, (0, 2, 3, 1)).reshape(cout, 4 * w3.shape[1])
    w4m = jnp.transpose(w4, (0, 2, 3, 1)).reshape(cout, 9 * cout) * s2[:, None]
    return (w1m, b1.reshape(cout, 1), w2m, w3m, w4m, b2.reshape(cout, 1))


# --------------------------------- wrapper ---------------------------------- #

@jax.jit
def basic_block_forward(x_nchw, packed):
    """Forward pass of BasicBlock. x_nchw: (N, C, H, W) float32."""
    w1m, b1c, w2m, w3m, w4m, b2c = packed
    N, Cin, H, W = x_nchw.shape
    Cout = w1m.shape[0]
    C2 = w2m.shape[0]
    assert Cin == Cout, "downsample=None requires in_channels == out_channels"
    Wc = W + 2
    Lo = H * Wc
    Lx = (H + 4) * Wc

    # Canvas layout: x at canvas rows 2..H+1, cols 1..W; zeros elsewhere.
    # (The zero ring is conv1's padding; the extra rows are shift margin.)
    xc = jnp.pad(x_nchw, ((0, 0), (0, 0), (2, 2), (1, 1))).reshape(N, Cin, Lx)

    # Halo-column mask (compile-time constant): 0 at canvas cols 0 and W+1.
    col = np.arange(Lo) % Wc
    mask = jnp.asarray(((col != 0) & (col != W + 1)).astype(np.float32))[None, :]

    out = pl.pallas_call(
        functools.partial(_fused_basic_block_kernel, H=H, W=W),
        out_shape=jax.ShapeDtypeStruct((N, Cout, Lo), jnp.float32),
        grid=(N,),
        in_specs=[
            pl.BlockSpec((1, Cin, Lx), lambda n: (n, 0, 0)),
            pl.BlockSpec((Cout, 9 * Cin), lambda n: (0, 0)),
            pl.BlockSpec((Cout, 1), lambda n: (0, 0)),
            pl.BlockSpec((C2, Cout), lambda n: (0, 0)),
            pl.BlockSpec((Cout, 4 * C2), lambda n: (0, 0)),
            pl.BlockSpec((Cout, 9 * Cout), lambda n: (0, 0)),
            pl.BlockSpec((Cout, 1), lambda n: (0, 0)),
            pl.BlockSpec((1, Lo), lambda n: (0, 0)),
        ],
        out_specs=pl.BlockSpec((1, Cout, Lo), lambda n: (n, 0, 0)),
        compiler_params=pltpu.CompilerParams(
            dimension_semantics=("parallel",)),
    )(xc, w1m, b1c, w2m, w3m, w4m, b2c, mask)

    # Strip the 1-column halo: (N, C, H*Wc) -> (N, C, H, W); already NCHW.
    return out.reshape(N, Cout, H, Wc)[:, :, :, 1:W + 1]


# ----------------------------- reference (JAX) ------------------------------ #

def reference_forward(x, raw):
    (w1, w2, w3, w4, g1, be1, m1, v1, g2, be2, m2, v2, eps) = raw

    def conv(x_, w_, pad):
        return jax.lax.conv_general_dilated(
            x_, w_, window_strides=(1, 1),
            padding=[(pad, pad), (pad, pad)],
            dimension_numbers=("NCHW", "OIHW", "NCHW"))

    def bn(x_, g, b, m, v):
        sh = (1, -1, 1, 1)
        return (x_ - m.reshape(sh)) / jnp.sqrt(v.reshape(sh) + eps) \
            * g.reshape(sh) + b.reshape(sh)

    out = conv(x, w1, 1)
    out = jnp.maximum(bn(out, g1, be1, m1, v1), 0.0)
    out = conv(out, w2, 0)
    out = jnp.pad(out, ((0, 0), (0, 0), (1, 0), (1, 0)))   # ZeroPad2d((1,0,1,0))
    out = jnp.maximum(conv(out, w3, 0), 0.0)
    out = conv(out, w4, 1)
    out = bn(out, g2, be2, m2, v2)
    out = out + x
    return jnp.maximum(out, 0.0)


# --------------------------------- main ------------------------------------ #

if __name__ == "__main__":
    N, Cin, Cout, H, W = 2, 8, 8, 16, 16     # stride=1, downsample=None
    eps = 1e-5

    key = jax.random.PRNGKey(0)
    kx, k1, k2, k3, k4 = jax.random.split(key, 5)

    x = jax.random.normal(kx, (N, Cin, H, W), dtype=jnp.float32)

    # conv weights (PyTorch OIHW layout), deterministic init
    w1 = 0.1 * jax.random.normal(k1, (Cout, Cin, 3, 3), dtype=jnp.float32)
    w2 = 0.1 * jax.random.normal(k2, (4, Cout, 1, 1), dtype=jnp.float32)
    w3 = 0.1 * jax.random.normal(k3, (Cout, 4, 2, 2), dtype=jnp.float32)
    w4 = 0.1 * jax.random.normal(k4, (Cout, Cout, 3, 3), dtype=jnp.float32)

    # BatchNorm parameters / running stats (deterministic, inference mode)
    ar = jnp.arange(Cout, dtype=jnp.float32)
    g1, be1 = 1.0 + 0.10 * ar, 0.05 * ar - 0.10
    m1, v1 = 0.01 * ar, 1.0 + 0.02 * ar
    g2, be2 = 1.0 - 0.03 * ar, 0.02 * ar + 0.05
    m2, v2 = -0.02 * ar, 1.0 + 0.05 * ar

    packed = pack_basic_block_params(w1, w2, w3, w4, g1, be1, m1, v1,
                                     g2, be2, m2, v2, eps)

    out = basic_block_forward(x, packed)
    out = jax.block_until_ready(out)

    ref = reference_forward(
        x, (w1, w2, w3, w4, g1, be1, m1, v1, g2, be2, m2, v2, eps))
    ref = jax.block_until_ready(ref)

    np.testing.assert_allclose(np.asarray(out), np.asarray(ref),
                               rtol=1e-3, atol=1e-3)
    print("KERNEL_OK")
</pallas_src>

<mosaic_0001>
module attributes {stable_mosaic.version = 11 : i64} {
  func.func @_fused_basic_block_kernel(%arg0: i32, %arg1: memref<1x8x360xf32, #tpu.memory_space<vmem>>, %arg2: memref<8x72xf32, #tpu.memory_space<vmem>>, %arg3: memref<8x1xf32, #tpu.memory_space<vmem>>, %arg4: memref<4x8xf32, #tpu.memory_space<vmem>>, %arg5: memref<8x16xf32, #tpu.memory_space<vmem>>, %arg6: memref<8x72xf32, #tpu.memory_space<vmem>>, %arg7: memref<8x1xf32, #tpu.memory_space<vmem>>, %arg8: memref<1x288xf32, #tpu.memory_space<vmem>>, %arg9: memref<1x8x288xf32, #tpu.memory_space<vmem>>) attributes {dimension_semantics = [#tpu.dimension_semantics<parallel>], iteration_bounds = array<i64: 2>, scalar_prefetch = 0 : i64, scratch_operands = 0 : i64, tpu.core_type = #tpu.core_type<tc>, window_params = [{transform_indices = @transform_0, window_bounds = array<i64: 1, 8, 360>}, {pipeline_mode = #tpu.pipeline_mode<synchronous>, transform_indices = @transform_1, window_bounds = array<i64: 8, 72>}, {pipeline_mode = #tpu.pipeline_mode<synchronous>, transform_indices = @transform_2, window_bounds = array<i64: 8, 1>}, {pipeline_mode = #tpu.pipeline_mode<synchronous>, transform_indices = @transform_3, window_bounds = array<i64: 4, 8>}, {pipeline_mode = #tpu.pipeline_mode<synchronous>, transform_indices = @transform_4, window_bounds = array<i64: 8, 16>}, {pipeline_mode = #tpu.pipeline_mode<synchronous>, transform_indices = @transform_5, window_bounds = array<i64: 8, 72>}, {pipeline_mode = #tpu.pipeline_mode<synchronous>, transform_indices = @transform_6, window_bounds = array<i64: 8, 1>}, {pipeline_mode = #tpu.pipeline_mode<synchronous>, transform_indices = @transform_7, window_bounds = array<i64: 1, 288>}, {transform_indices = @transform_8, window_bounds = array<i64: 1, 8, 288>}]} {
    %c0 = arith.constant 0 : index
    %c0_0 = arith.constant 0 : index
    %c0_1 = arith.constant 0 : index
    %0 = vector.load %arg1[%c0, %c0_0, %c0_1] : memref<1x8x360xf32, #tpu.memory_space<vmem>>, vector<1x8x360xf32>
    %1 = vector.shape_cast %0 : vector<1x8x360xf32> to vector<8x360xf32>
    %c0_2 = arith.constant 0 : index
    %c0_3 = arith.constant 0 : index
    %2 = vector.load %arg8[%c0_2, %c0_3] : memref<1x288xf32, #tpu.memory_space<vmem>>, vector<1x288xf32>
    %c0_4 = arith.constant 0 : index
    %c0_5 = arith.constant 0 : index
    %3 = vector.load %arg2[%c0_4, %c0_5] : memref<8x72xf32, #tpu.memory_space<vmem>>, vector<8x72xf32>
    %4 = vector.extract_strided_slice %1 {offsets = [0, 17], sizes = [8, 288], strides = [1, 1]} : vector<8x360xf32> to vector<8x288xf32>
    %5 = vector.extract_strided_slice %1 {offsets = [0, 18], sizes = [8, 288], strides = [1, 1]} : vector<8x360xf32> to vector<8x288xf32>
    %6 = vector.extract_strided_slice %1 {offsets = [0, 19], sizes = [8, 288], strides = [1, 1]} : vector<8x360xf32> to vector<8x288xf32>
    %7 = vector.extract_strided_slice %1 {offsets = [0, 35], sizes = [8, 288], strides = [1, 1]} : vector<8x360xf32> to vector<8x288xf32>
    %8 = vector.extract_strided_slice %1 {offsets = [0, 36], sizes = [8, 288], strides = [1, 1]} : vector<8x360xf32> to vector<8x288xf32>
    %9 = vector.extract_strided_slice %1 {offsets = [0, 37], sizes = [8, 288], strides = [1, 1]} : vector<8x360xf32> to vector<8x288xf32>
    %10 = vector.extract_strided_slice %1 {offsets = [0, 53], sizes = [8, 288], strides = [1, 1]} : vector<8x360xf32> to vector<8x288xf32>
    %11 = vector.extract_strided_slice %1 {offsets = [0, 54], sizes = [8, 288], strides = [1, 1]} : vector<8x360xf32> to vector<8x288xf32>
    %12 = vector.extract_strided_slice %1 {offsets = [0, 55], sizes = [8, 288], strides = [1, 1]} : vector<8x360xf32> to vector<8x288xf32>
    %13 = tpu.concatenate %4, %5, %6, %7, %8, %9, %10, %11, %12 in 0 : vector<8x288xf32>, vector<8x288xf32>, vector<8x288xf32>, vector<8x288xf32>, vector<8x288xf32>, vector<8x288xf32>, vector<8x288xf32>, vector<8x288xf32>, vector<8x288xf32> -> vector<72x288xf32>
    %cst = arith.constant dense<0.000000e+00> : vector<8x288xf32>
    %14 = tpu.matmul %3, %13, %cst {dimension_numbers = #tpu.dot_dimension_numbers<[1], [0], [0], [1], [0, 0, 1, 1], [], []>} : vector<8x72xf32>, vector<72x288xf32>, vector<8x288xf32> -> vector<8x288xf32>
    %c0_6 = arith.constant 0 : index
    %c0_7 = arith.constant 0 : index
    %15 = vector.load %arg3[%c0_6, %c0_7] : memref<8x1xf32, #tpu.memory_space<vmem>>, vector<8x1xf32>
    %16 = vector.broadcast %15 : vector<8x1xf32> to vector<8x288xf32>
    %17 = arith.addf %14, %16 : vector<8x288xf32>
    %cst_8 = arith.constant 0.000000e+00 : f32
    %18 = vector.broadcast %cst_8 : f32 to vector<8x288xf32>
    %19 = arith.maximumf %17, %18 : vector<8x288xf32>
    %c0_9 = arith.constant 0 : index
    %c0_10 = arith.constant 0 : index
    %20 = vector.load %arg4[%c0_9, %c0_10] : memref<4x8xf32, #tpu.memory_space<vmem>>, vector<4x8xf32>
    %cst_11 = arith.constant dense<0.000000e+00> : vector<4x288xf32>
    %21 = tpu.matmul %20, %19, %cst_11 {dimension_numbers = #tpu.dot_dimension_numbers<[1], [0], [0], [1], [0, 0, 1, 1], [], []>} : vector<4x8xf32>, vector<8x288xf32>, vector<4x288xf32> -> vector<4x288xf32>
    %22 = vector.broadcast %2 : vector<1x288xf32> to vector<4x288xf32>
    %23 = arith.mulf %21, %22 : vector<4x288xf32>
    %cst_12 = arith.constant 0.000000e+00 : f32
    %24 = vector.broadcast %cst_12 : f32 to vector<4x36xf32>
    %25 = tpu.concatenate %24, %23 in 1 : vector<4x36xf32>, vector<4x288xf32> -> vector<4x324xf32>
    %c0_13 = arith.constant 0 : index
    %c0_14 = arith.constant 0 : index
    %26 = vector.load %arg5[%c0_13, %c0_14] : memref<8x16xf32, #tpu.memory_space<vmem>>, vector<8x16xf32>
    %27 = vector.extract_strided_slice %25 {offsets = [0, 17], sizes = [4, 288], strides = [1, 1]} : vector<4x324xf32> to vector<4x288xf32>
    %28 = vector.extract_strided_slice %25 {offsets = [0, 18], sizes = [4, 288], strides = [1, 1]} : vector<4x324xf32> to vector<4x288xf32>
    %29 = vector.extract_strided_slice %25 {offsets = [0, 35], sizes = [4, 288], strides = [1, 1]} : vector<4x324xf32> to vector<4x288xf32>
    %30 = vector.extract_strided_slice %25 {offsets = [0, 36], sizes = [4, 288], strides = [1, 1]} : vector<4x324xf32> to vector<4x288xf32>
    %31 = tpu.concatenate %27, %28, %29, %30 in 0 : vector<4x288xf32>, vector<4x288xf32>, vector<4x288xf32>, vector<4x288xf32> -> vector<16x288xf32>
    %cst_15 = arith.constant dense<0.000000e+00> : vector<8x288xf32>
    %32 = tpu.matmul %26, %31, %cst_15 {dimension_numbers = #tpu.dot_dimension_numbers<[1], [0], [0], [1], [0, 0, 1, 1], [], []>} : vector<8x16xf32>, vector<16x288xf32>, vector<8x288xf32> -> vector<8x288xf32>
    %cst_16 = arith.constant 0.000000e+00 : f32
    %33 = vector.broadcast %cst_16 : f32 to vector<8x288xf32>
    %34 = arith.maximumf %32, %33 : vector<8x288xf32>
    %35 = vector.broadcast %2 : vector<1x288xf32> to vector<8x288xf32>
    %36 = arith.mulf %34, %35 : vector<8x288xf32>
    %cst_17 = arith.constant 0.000000e+00 : f32
    %37 = vector.broadcast %cst_17 : f32 to vector<8x36xf32>
    %38 = tpu.concatenate %37, %36, %37 in 1 : vector<8x36xf32>, vector<8x288xf32>, vector<8x36xf32> -> vector<8x360xf32>
    %c0_18 = arith.constant 0 : index
    %c0_19 = arith.constant 0 : index
    %39 = vector.load %arg6[%c0_18, %c0_19] : memref<8x72xf32, #tpu.memory_space<vmem>>, vector<8x72xf32>
    %40 = vector.extract_strided_slice %38 {offsets = [0, 17], sizes = [8, 288], strides = [1, 1]} : vector<8x360xf32> to vector<8x288xf32>
    %41 = vector.extract_strided_slice %38 {offsets = [0, 18], sizes = [8, 288], strides = [1, 1]} : vector<8x360xf32> to vector<8x288xf32>
    %42 = vector.extract_strided_slice %38 {offsets = [0, 19], sizes = [8, 288], strides = [1, 1]} : vector<8x360xf32> to vector<8x288xf32>
    %43 = vector.extract_strided_slice %38 {offsets = [0, 35], sizes = [8, 288], strides = [1, 1]} : vector<8x360xf32> to vector<8x288xf32>
    %44 = vector.extract_strided_slice %38 {offsets = [0, 36], sizes = [8, 288], strides = [1, 1]} : vector<8x360xf32> to vector<8x288xf32>
    %45 = vector.extract_strided_slice %38 {offsets = [0, 37], sizes = [8, 288], strides = [1, 1]} : vector<8x360xf32> to vector<8x288xf32>
    %46 = vector.extract_strided_slice %38 {offsets = [0, 53], sizes = [8, 288], strides = [1, 1]} : vector<8x360xf32> to vector<8x288xf32>
    %47 = vector.extract_strided_slice %38 {offsets = [0, 54], sizes = [8, 288], strides = [1, 1]} : vector<8x360xf32> to vector<8x288xf32>
    %48 = vector.extract_strided_slice %38 {offsets = [0, 55], sizes = [8, 288], strides = [1, 1]} : vector<8x360xf32> to vector<8x288xf32>
    %49 = tpu.concatenate %40, %41, %42, %43, %44, %45, %46, %47, %48 in 0 : vector<8x288xf32>, vector<8x288xf32>, vector<8x288xf32>, vector<8x288xf32>, vector<8x288xf32>, vector<8x288xf32>, vector<8x288xf32>, vector<8x288xf32>, vector<8x288xf32> -> vector<72x288xf32>
    %cst_20 = arith.constant dense<0.000000e+00> : vector<8x288xf32>
    %50 = tpu.matmul %39, %49, %cst_20 {dimension_numbers = #tpu.dot_dimension_numbers<[1], [0], [0], [1], [0, 0, 1, 1], [], []>} : vector<8x72xf32>, vector<72x288xf32>, vector<8x288xf32> -> vector<8x288xf32>
    %c0_21 = arith.constant 0 : index
    %c0_22 = arith.constant 0 : index
    %51 = vector.load %arg7[%c0_21, %c0_22] : memref<8x1xf32, #tpu.memory_space<vmem>>, vector<8x1xf32>
    %52 = vector.broadcast %51 : vector<8x1xf32> to vector<8x288xf32>
    %53 = arith.addf %50, %52 : vector<8x288xf32>
    %54 = vector.extract_strided_slice %1 {offsets = [0, 36], sizes = [8, 288], strides = [1, 1]} : vector<8x360xf32> to vector<8x288xf32>
    %55 = arith.addf %53, %54 : vector<8x288xf32>
    %cst_23 = arith.constant 0.000000e+00 : f32
    %56 = vector.broadcast %cst_23 : f32 to vector<8x288xf32>
    %57 = arith.maximumf %55, %56 : vector<8x288xf32>
    %c0_24 = arith.constant 0 : index
    %c0_25 = arith.constant 0 : index
    %c0_26 = arith.constant 0 : index
    %58 = vector.load %arg9[%c0_24, %c0_25, %c0_26] : memref<1x8x288xf32, #tpu.memory_space<vmem>>, vector<1x8x288xf32>
    %59 = vector.shape_cast %58 : vector<1x8x288xf32> to vector<8x288xf32>
    %60 = vector.shape_cast %57 : vector<8x288xf32> to vector<1x8x288xf32>
    tpu.vector_store %arg9[%c0_24, %c0_25, %c0_26], %60 {strides = array<i32>} : memref<1x8x288xf32, #tpu.memory_space<vmem>>, vector<1x8x288xf32>,
    return
  }
  func.func @transform_0(%arg0: i32) -> (i32, i32, i32) {
    %c0_i32 = arith.constant 0 : i32
    %c0_i32_0 = arith.constant 0 : i32
    %c0_i32_1 = arith.constant 0 : i32
    return %arg0, %c0_i32, %c0_i32_0 : i32, i32, i32
  }
  func.func @transform_1(%arg0: i32) -> (i32, i32) {
    %c0_i32 = arith.constant 0 : i32
    %c0_i32_0 = arith.constant 0 : i32
    %c0_i32_1 = arith.constant 0 : i32
    return %c0_i32, %c0_i32_0 : i32, i32
  }
  func.func @transform_2(%arg0: i32) -> (i32, i32) {
    %c0_i32 = arith.constant 0 : i32
    %c0_i32_0 = arith.constant 0 : i32
    %c0_i32_1 = arith.constant 0 : i32
    return %c0_i32, %c0_i32_0 : i32, i32
  }
  func.func @transform_3(%arg0: i32) -> (i32, i32) {
    %c0_i32 = arith.constant 0 : i32
    %c0_i32_0 = arith.constant 0 : i32
    %c0_i32_1 = arith.constant 0 : i32
    return %c0_i32, %c0_i32_0 : i32, i32
  }
  func.func @transform_4(%arg0: i32) -> (i32, i32) {
    %c0_i32 = arith.constant 0 : i32
    %c0_i32_0 = arith.constant 0 : i32
    %c0_i32_1 = arith.constant 0 : i32
    return %c0_i32, %c0_i32_0 : i32, i32
  }
  func.func @transform_5(%arg0: i32) -> (i32, i32) {
    %c0_i32 = arith.constant 0 : i32
    %c0_i32_0 = arith.constant 0 : i32
    %c0_i32_1 = arith.constant 0 : i32
    return %c0_i32, %c0_i32_0 : i32, i32
  }
  func.func @transform_6(%arg0: i32) -> (i32, i32) {
    %c0_i32 = arith.constant 0 : i32
    %c0_i32_0 = arith.constant 0 : i32
    %c0_i32_1 = arith.constant 0 : i32
    return %c0_i32, %c0_i32_0 : i32, i32
  }
  func.func @transform_7(%arg0: i32) -> (i32, i32) {
    %c0_i32 = arith.constant 0 : i32
    %c0_i32_0 = arith.constant 0 : i32
    %c0_i32_1 = arith.constant 0 : i32
    return %c0_i32, %c0_i32_0 : i32, i32
  }
  func.func @transform_8(%arg0: i32) -> (i32, i32, i32) {
    %c0_i32 = arith.constant 0 : i32
    %c0_i32_0 = arith.constant 0 : i32
    %c0_i32_1 = arith.constant 0 : i32
    return %arg0, %c0_i32, %c0_i32_0 : i32, i32, i32
  }
}

</mosaic_0001>

<llo_original>
// kernel: basic_block_forward.1
$region0: #{basic_block_forward.1}
  #allocation0 [shape = 'u32[]', space=smem, size = 0x4, offset = 0x4, fixed_abs, tag = 'smem constant byte address 0x4 - core index']
  #allocation1 [shape = 'u32[72,128]{1,0:T(1,128)}', space=vmem, size = 0x9000, scoped, tag = 'internal scratch']
  %s0 = inlined_call_operand.vmem [shape: f32[2,8,360], index: 0, kind: input, shape index: {}]
  %s1 = inlined_call_operand.vmem [shape: f32[8,72], index: 1, kind: input, shape index: {}]
  %s2 = inlined_call_operand.vmem [shape: f32[8,1], index: 2, kind: input, shape index: {}]
  %s3 = inlined_call_operand.vmem [shape: f32[4,8], index: 3, kind: input, shape index: {}]
  %s4 = inlined_call_operand.vmem [shape: f32[8,16], index: 4, kind: input, shape index: {}]
  %s5 = inlined_call_operand.vmem [shape: f32[8,72], index: 5, kind: input, shape index: {}]
  %s6 = inlined_call_operand.vmem [shape: f32[8,1], index: 6, kind: input, shape index: {}]
  %s7 = inlined_call_operand.vmem [shape: f32[1,288], index: 7, kind: input, shape index: {}]
  %s8 = inlined_call_operand.vmem [shape: f32[2,8,288], index: 8, kind: output, shape index: {}]
  %s9 = sld [smem:[#allocation0]]
  $region65: #{basic_block_forward.1} parent=0
    _
  %s11 = ssub.s32 1, %s9
  %s12 = scalar_select 0, %s11, %s9
  loop: start=0, step=1, limit=4
  $region2: #{basic_block_forward.1} parent=0 // loop_pre_header
    _
  $region3: #{basic_block_forward.1} parent=0 // loop_header
    %s14 = sphi 0, %s18
    %p15 = scmp.ge.s32.totalorder %s14, 4
    %s24 = sphi 0, %s26
    %s27 = sphi 0, %s24
    %s28 = sphi 0, %s27
    %s44 = sphi 0, %s28
    %s48 = sphi 0, %s48
    %s50 = sphi 0, %s48
    %s51 = sphi 0, %s50
    %s65 = sphi 0, %s51
    %s69 = sphi 0, %s69
    %s71 = sphi 0, %s69
    %s72 = sphi 0, %s71
    %s86 = sphi 0, %s72
    %s90 = sphi 0, %s90
    %s92 = sphi 0, %s90
    %s93 = sphi 0, %s92
    %s107 = sphi 0, %s93
    %s111 = sphi 0, %s111
    %s113 = sphi 0, %s111
    %s114 = sphi 0, %s113
    %s128 = sphi 0, %s114
    %s132 = sphi 0, %s132
    %s134 = sphi 0, %s132
    %s135 = sphi 0, %s134
    %s149 = sphi 0, %s135
    %s153 = sphi 0, %s153
    %s155 = sphi 0, %s153
    %s156 = sphi 0, %s155
    %s170 = sphi 0, %s156
    %s174 = sphi 0, %s174
    %s176 = sphi 0, %s174
    %s177 = sphi 0, %s176
    %s191 = sphi 0, %s177
    %s197 = sphi 0, %s199
    %s200 = sphi 0, %s197
    %s201 = sphi 0, %s200
    %s217 = sphi 0, %s201
  $region4: #{basic_block_forward.1} parent=0 // loop_header_branch
    %17 = sbr.rel (%p15) target = $region8
  $region5: #{basic_block_forward.1} parent=0 // loop_body
    %s19 = ssub.s32 %s14, 1
    %s20 = ssub.s32 %s14, 2
    %s21 = sadd.s32 %s14, 1
    %s22 = ssub.s32 %s14, %s21
    %p23 = scmp.eq.s32.totalorder %s22, 0
    %s25 = sadd.s32 %s24, 1
    %s26 = scalar_select %p23, %s24, %s25
    %p29 = pneg %p23
    %p30 = scmp.eq.s32.totalorder %s14, 1
    %p31 = por %p29, %p30
    %p32 = scmp.ne.s32.totalorder %s24, %s27
    %p33 = scmp.eq.s32.totalorder %s14, 0
    %p34 = por %p32, %p33
    %p35 = scmp.ne.s32.totalorder %s24, %s27
    %p36 = scmp.eq.s32.totalorder %s19, 1
    %p37 = por %p35, %p36
    %p38 = scmp.ne.s32.totalorder %s27, %s28
    %p39 = scmp.eq.s32.totalorder %s19, 0
    %p40 = por %p38, %p39
    %p41 = scmp.ne.s32.totalorder %s27, %s28
    %p42 = scmp.eq.s32.totalorder %s20, 1
    %p43 = por %p41, %p42
    %p45 = scmp.ne.s32.totalorder %s28, %s44
    %p46 = scmp.eq.s32.totalorder %s20, 0
    %p47 = por %p45, %p46
    %s49 = sadd.s32 %s48, 1
    %p52 = scmp.eq.s32.totalorder %s14, 1
    %p53 = scmp.ne.s32.totalorder %s48, %s50
    %p54 = scmp.eq.s32.totalorder %s14, 0
    %p55 = por %p53, %p54
    %p56 = scmp.ne.s32.totalorder %s48, %s50
    %p57 = scmp.eq.s32.totalorder %s19, 1
    %p58 = por %p56, %p57
    %p59 = scmp.ne.s32.totalorder %s50, %s51
    %p60 = scmp.eq.s32.totalorder %s19, 0
    %p61 = por %p59, %p60
    %p62 = scmp.ne.s32.totalorder %s50, %s51
    %p63 = scmp.eq.s32.totalorder %s20, 1
    %p64 = por %p62, %p63
    %p66 = scmp.ne.s32.totalorder %s51, %s65
    %p67 = scmp.eq.s32.totalorder %s20, 0
    %p68 = por %p66, %p67
    %s70 = sadd.s32 %s69, 1
    %p73 = scmp.eq.s32.totalorder %s14, 1
    %p74 = scmp.ne.s32.totalorder %s69, %s71
    %p75 = scmp.eq.s32.totalorder %s14, 0
    %p76 = por %p74, %p75
    %p77 = scmp.ne.s32.totalorder %s69, %s71
    %p78 = scmp.eq.s32.totalorder %s19, 1
    %p79 = por %p77, %p78
    %p80 = scmp.ne.s32.totalorder %s71, %s72
    %p81 = scmp.eq.s32.totalorder %s19, 0
    %p82 = por %p80, %p81
    %p83 = scmp.ne.s32.totalorder %s71, %s72
    %p84 = scmp.eq.s32.totalorder %s20, 1
    %p85 = por %p83, %p84
    %p87 = scmp.ne.s32.totalorder %s72, %s86
    %p88 = scmp.eq.s32.totalorder %s20, 0
    %p89 = por %p87, %p88
    %s91 = sadd.s32 %s90, 1
    %p94 = scmp.eq.s32.totalorder %s14, 1
    %p95 = scmp.ne.s32.totalorder %s90, %s92
    %p96 = scmp.eq.s32.totalorder %s14, 0
    %p97 = por %p95, %p96
    %p98 = scmp.ne.s32.totalorder %s90, %s92
    %p99 = scmp.eq.s32.totalorder %s19, 1
    %p100 = por %p98, %p99
    %p101 = scmp.ne.s32.totalorder %s92, %s93
    %p102 = scmp.eq.s32.totalorder %s19, 0
    %p103 = por %p101, %p102
    %p104 = scmp.ne.s32.totalorder %s92, %s93
    %p105 = scmp.eq.s32.totalorder %s20, 1
    %p106 = por %p104, %p105
    %p108 = scmp.ne.s32.totalorder %s93, %s107
    %p109 = scmp.eq.s32.totalorder %s20, 0
    %p110 = por %p108, %p109
    %s112 = sadd.s32 %s111, 1
    %p115 = scmp.eq.s32.totalorder %s14, 1
    %p116 = scmp.ne.s32.totalorder %s111, %s113
    %p117 = scmp.eq.s32.totalorder %s14, 0
    %p118 = por %p116, %p117
    %p119 = scmp.ne.s32.totalorder %s111, %s113
    %p120 = scmp.eq.s32.totalorder %s19, 1
    %p121 = por %p119, %p120
    %p122 = scmp.ne.s32.totalorder %s113, %s114
    %p123 = scmp.eq.s32.totalorder %s19, 0
    %p124 = por %p122, %p123
    %p125 = scmp.ne.s32.totalorder %s113, %s114
    %p126 = scmp.eq.s32.totalorder %s20, 1
    %p127 = por %p125, %p126
    %p129 = scmp.ne.s32.totalorder %s114, %s128
    %p130 = scmp.eq.s32.totalorder %s20, 0
    %p131 = por %p129, %p130
    %s133 = sadd.s32 %s132, 1
    %p136 = scmp.eq.s32.totalorder %s14, 1
    %p137 = scmp.ne.s32.totalorder %s132, %s134
    %p138 = scmp.eq.s32.totalorder %s14, 0
    %p139 = por %p137, %p138
    %p140 = scmp.ne.s32.totalorder %s132, %s134
    %p141 = scmp.eq.s32.totalorder %s19, 1
    %p142 = por %p140, %p141
    %p143 = scmp.ne.s32.totalorder %s134, %s135
    %p144 = scmp.eq.s32.totalorder %s19, 0
    %p145 = por %p143, %p144
    %p146 = scmp.ne.s32.totalorder %s134, %s135
    %p147 = scmp.eq.s32.totalorder %s20, 1
    %p148 = por %p146, %p147
    %p150 = scmp.ne.s32.totalorder %s135, %s149
    %p151 = scmp.eq.s32.totalorder %s20, 0
    %p152 = por %p150, %p151
    %s154 = sadd.s32 %s153, 1
    %p157 = scmp.eq.s32.totalorder %s14, 1
    %p158 = scmp.ne.s32.totalorder %s153, %s155
    %p159 = scmp.eq.s32.totalorder %s14, 0
    %p160 = por %p158, %p159
    %p161 = scmp.ne.s32.totalorder %s153, %s155
    %p162 = scmp.eq.s32.totalorder %s19, 1
    %p163 = por %p161, %p162
    %p164 = scmp.ne.s32.totalorder %s155, %s156
    %p165 = scmp.eq.s32.totalorder %s19, 0
    %p166 = por %p164, %p165
    %p167 = scmp.ne.s32.totalorder %s155, %s156
    %p168 = scmp.eq.s32.totalorder %s20, 1
    %p169 = por %p167, %p168
    %p171 = scmp.ne.s32.totalorder %s156, %s170
    %p172 = scmp.eq.s32.totalorder %s20, 0
    %p173 = por %p171, %p172
    %s175 = sadd.s32 %s174, 1
    %p178 = scmp.eq.s32.totalorder %s14, 1
    %p179 = scmp.ne.s32.totalorder %s174, %s176
    %p180 = scmp.eq.s32.totalorder %s14, 0
    %p181 = por %p179, %p180
    %p182 = scmp.ne.s32.totalorder %s174, %s176
    %p183 = scmp.eq.s32.totalorder %s19, 1
    %p184 = por %p182, %p183
    %p185 = scmp.ne.s32.totalorder %s176, %s177
    %p186 = scmp.eq.s32.totalorder %s19, 0
    %p187 = por %p185, %p186
    %p188 = scmp.ne.s32.totalorder %s176, %s177
    %p189 = scmp.eq.s32.totalorder %s20, 1
    %p190 = por %p188, %p189
    %p192 = scmp.ne.s32.totalorder %s177, %s191
    %p193 = scmp.eq.s32.totalorder %s20, 0
    %p194 = por %p192, %p193
    %s195 = ssub.s32 %s14, %s21
    %p196 = scmp.eq.s32.totalorder %s195, 0
    %s198 = sadd.s32 %s197, 1
    %s199 = scalar_select %p196, %s197, %s198
    %p202 = pneg %p196
    %p203 = scmp.eq.s32.totalorder %s14, 1
    %p204 = por %p202, %p203
    %p205 = scmp.ne.s32.totalorder %s197, %s200
    %p206 = scmp.eq.s32.totalorder %s14, 0
    %p207 = por %p205, %p206
    %p208 = scmp.ne.s32.totalorder %s197, %s200
    %p209 = scmp.eq.s32.totalorder %s19, 1
    %p210 = por %p208, %p209
    %p211 = scmp.ne.s32.totalorder %s200, %s201
    %p212 = scmp.eq.s32.totalorder %s19, 0
    %p213 = por %p211, %p212
    %p214 = scmp.ne.s32.totalorder %s200, %s201
    %p215 = scmp.eq.s32.totalorder %s20, 1
    %p216 = por %p214, %p215
    %p218 = scmp.ne.s32.totalorder %s201, %s217
    %p219 = scmp.eq.s32.totalorder %s20, 0
    %p220 = por %p218, %p219
    %p221 = scmp.le.s32.totalorder 1, %s14
    %p222 = scmp.lt.s32.totalorder %s14, 3
    %p223 = pnand %p221, %p222
    %p224 = pneg %p223
    // Predicated region
    $region9: #{basic_block_forward.1} parent=5 // pred_check
      _
    $region10: #{basic_block_forward.1} parent=5 // pred_check_branch
      %226 = sbr.rel (%p223) target = $region12
    $region11: #{basic_block_forward.1} parent=5 // pred_region
      %s227 = ssub.s32 %s14, 1
      // Predicated region
      $region13: #{basic_block_forward.1} parent=11 // pred_check
        %p228 = pneg %p61
      $region14: #{basic_block_forward.1} parent=11 // pred_check_branch
        %230 = sbr.rel (%p228) target = $region16
      $region15: #{basic_block_forward.1} parent=11 // pred_region
        _
      $region16: #{basic_block_forward.1} parent=11 // pred_fallthru
        _
      // Predicated region
      $region17: #{basic_block_forward.1} parent=11 // pred_check
        %p231 = pneg %p82
      $region18: #{basic_block_forward.1} parent=11 // pred_check_branch
        %233 = sbr.rel (%p231) target = $region20
      $region19: #{basic_block_forward.1} parent=11 // pred_region
        _
      $region20: #{basic_block_forward.1} parent=11 // pred_fallthru
        _
      // Predicated region
      $region21: #{basic_block_forward.1} parent=11 // pred_check
        %p234 = pneg %p103
      $region22: #{basic_block_forward.1} parent=11 // pred_check_branch
        %236 = sbr.rel (%p234) target = $region24
      $region23: #{basic_block_forward.1} parent=11 // pred_region
        _
      $region24: #{basic_block_forward.1} parent=11 // pred_fallthru
        _
      // Predicated region
      $region25: #{basic_block_forward.1} parent=11 // pred_check
        %p237 = pneg %p124
      $region26: #{basic_block_forward.1} parent=11 // pred_check_branch
        %239 = sbr.rel (%p237) target = $region28
      $region27: #{basic_block_forward.1} parent=11 // pred_region
        _
      $region28: #{basic_block_forward.1} parent=11 // pred_fallthru
        _
      // Predicated region
      $region29: #{basic_block_forward.1} parent=11 // pred_check
        %p240 = pneg %p145
      $region30: #{basic_block_forward.1} parent=11 // pred_check_branch
        %242 = sbr.rel (%p240) target = $region32
      $region31: #{basic_block_forward.1} parent=11 // pred_region
        _
      $region32: #{basic_block_forward.1} parent=11 // pred_fallthru
        _
      // Predicated region
      $region33: #{basic_block_forward.1} parent=11 // pred_check
        %p243 = pneg %p166
      $region34: #{basic_block_forward.1} parent=11 // pred_check_branch
        %245 = sbr.rel (%p243) target = $region36
      $region35: #{basic_block_forward.1} parent=11 // pred_region
        _
      $region36: #{basic_block_forward.1} parent=11 // pred_fallthru
        _
      // Predicated region
      $region37: #{basic_block_forward.1} parent=11 // pred_check
        %p246 = pneg %p187
      $region38: #{basic_block_forward.1} parent=11 // pred_check_branch
        %248 = sbr.rel (%p246) target = $region40
      $region39: #{basic_block_forward.1} parent=11 // pred_region
        _
      $region40: #{basic_block_forward.1} parent=11 // pred_fallthru
        _
    $region12: #{basic_block_forward.1} parent=5 // pred_fallthru
      _
    %p249 = scmp.lt.s32.totalorder %s14, 2
    // Predicated region
    $region41: #{basic_block_forward.1} parent=5 // pred_check
      %p250 = pneg %p249
    $region42: #{basic_block_forward.1} parent=5 // pred_check_branch
      %252 = sbr.rel (%p250) target = $region44
    $region43: #{basic_block_forward.1} parent=5 // pred_region
      // Predicated region
      $region45: #{basic_block_forward.1} parent=43 // pred_check
        %p253 = pneg %p34
      $region46: #{basic_block_forward.1} parent=43 // pred_check_branch
        %255 = sbr.rel (%p253) target = $region48
      $region47: #{basic_block_forward.1} parent=43 // pred_region
        %p256 = scmp.lt.s32.totalorder %s14, 1
        %s257 = scalar_select %p256, %s14, 1
        %s258 = smul.addr %s257, 3
        %s259 = smul.addr %s258, 8
        %s260 = scalar_lea.vmem %s0, %s259
      $region48: #{basic_block_forward.1} parent=43 // pred_fallthru
        _
    $region44: #{basic_block_forward.1} parent=5 // pred_fallthru
      _
    %p261 = scmp.le.s32.totalorder 1, %s14
    %p262 = scmp.lt.s32.totalorder %s14, 3
    %p263 = pnand %p261, %p262
    %p264 = pneg %p263
    // Predicated region
    $region49: #{basic_block_forward.1} parent=5 // pred_check
      _
    $region50: #{basic_block_forward.1} parent=5 // pred_check_branch
      %266 = sbr.rel (%p263) target = $region52
    $region51: #{basic_block_forward.1} parent=5 // pred_region
      %s267 = ssub.s32 %s14, 1
      %p268 = scmp.lt.s32.totalorder %s19, 1
      %s269 = scalar_select %p268, %s19, 1
      %s270 = smul.addr %s269, 3
      %s271 = smul.addr %s270, 8
      %s272 = scalar_lea.vmem %s0, %s271
      %p273 = pneg %p40
      %p274 = pneg %p37
      %p275 = pneg %p61
      %p276 = pneg %p58
      %p277 = pneg %p82
      %p278 = pneg %p79
      %p279 = pneg %p103
      %p280 = pneg %p100
      %p281 = pneg %p124
      %p282 = pneg %p121
      %p283 = pneg %p145
      %p284 = pneg %p142
      %p285 = pneg %p166
      %p286 = pneg %p163
      %p287 = pneg %p187
      %p288 = pneg %p184
      %p289 = pneg %p213
      %p290 = pneg %p210
      %p291 = scmp.lt.s32.totalorder %s19, 1
      %s292 = scalar_select %p291, %s19, 1
      %s293 = smul.addr %s292, 3
      %s294 = smul.addr %s293, 8
      %s295 = scalar_lea.vmem %s8, %s294
      %p296 = scmp.lt.s32.totalorder %s19, 1
      %s297 = scalar_select %p296, %s19, 1
      %s298 = smul.addr %s297, 3
      %s299 = smul.addr %s298, 8
      %s300 = scalar_lea.vmem %s0, %s299
      %p301 = scmp.lt.s32.totalorder %s19, 1
      %s302 = scalar_select %p301, %s19, 1
      %s303 = smul.addr %s302, 3
      %s304 = smul.addr %s303, 8
      %s305 = scalar_lea.vmem %s8, %s304
      %v306 = vld [vmem:[%s300] sm:$0xff]
      %v307 = vld [vmem:[%s300 + $0x8] sm:$0xff]
      %v308 = vld [vmem:[%s300 + $0x10] sm:$0xff]
      %v309 = vld [vmem:[%s7] sm:$0x7]
      %v310 = vld [vmem:[%s1] sm:$0xff]
      %314 = vrot.lane.b32.xlu0 %v306, 127
      %v315 = vpop.permute.xlu0 %314
      %316 = vrot.lane.b32.xlu0 %v307, 127
      %v317 = vpop.permute.xlu0 %316
      %318 = vrot.lane.b32.xlu0 %v308, 127
      %v319 = vpop.permute.xlu0 %318
      %vm320 = vcmask 1039360
      %v321 = vsel %vm320, %v315, %v317
      %v322 = vsel %vm320, %v317, %v319
      %323 = vrot.lane.b32.xlu0 %v306, 126
      %v324 = vpop.permute.xlu0 %323
      %325 = vrot.lane.b32.xlu0 %v307, 126
      %v326 = vpop.permute.xlu0 %325
      %327 = vrot.lane.b32.xlu0 %v308, 126
      %v328 = vpop.permute.xlu0 %327
      %vm329 = vcmask 1031168
      %v330 = vsel %vm329, %v324, %v326
      %v331 = vsel %vm329, %v326, %v328
      %332 = vrot.lane.b32.xlu0 %v306, 110
      %v333 = vpop.permute.xlu0 %332
      %334 = vrot.lane.b32.xlu0 %v307, 110
      %v335 = vpop.permute.xlu0 %334
      %336 = vrot.lane.b32.xlu0 %v308, 110
      %v337 = vpop.permute.xlu0 %336
      %vm338 = vcmask 900096
      %v339 = vsel %vm338, %v333, %v335
      %v340 = vsel %vm338, %v335, %v337
      %341 = vrot.lane.b32.xlu0 %v306, 109
      %v342 = vpop.permute.xlu0 %341
      %343 = vrot.lane.b32.xlu0 %v307, 109
      %v344 = vpop.permute.xlu0 %343
      %345 = vrot.lane.b32.xlu0 %v308, 109
      %v346 = vpop.permute.xlu0 %345
      %vm347 = vcmask 891904
      %v348 = vsel %vm347, %v342, %v344
      %v349 = vsel %vm347, %v344, %v346
      %350 = vrot.lane.b32.xlu0 %v306, 108
      %v351 = vpop.permute.xlu0 %350
      %352 = vrot.lane.b32.xlu0 %v307, 108
      %v353 = vpop.permute.xlu0 %352
      %354 = vrot.lane.b32.xlu0 %v308, 108
      %v355 = vpop.permute.xlu0 %354
      %vm356 = vcmask 883712
      %v357 = vsel %vm356, %v351, %v353
      %v358 = vsel %vm356, %v353, %v355
      %359 = vrot.lane.b32.xlu0 %v306, 92
      %v360 = vpop.permute.xlu0 %359
      %361 = vrot.lane.b32.xlu0 %v307, 92
      %v362 = vpop.permute.xlu0 %361
      %363 = vrot.lane.b32.xlu0 %v308, 92
      %v364 = vpop.permute.xlu0 %363
      %vm365 = vcmask 752640
      %v366 = vsel %vm365, %v360, %v362
      %v367 = vsel %vm365, %v362, %v364
      %368 = vrot.lane.b32.xlu0 %v306, 91
      %v369 = vpop.permute.xlu0 %368
      %370 = vrot.lane.b32.xlu0 %v307, 91
      %v371 = vpop.permute.xlu0 %370
      %372 = vrot.lane.b32.xlu0 %v308, 91
      %v373 = vpop.permute.xlu0 %372
      %vm374 = vcmask 744448
      %v375 = vsel %vm374, %v369, %v371
      %v376 = vsel %vm374, %v371, %v373
      %377 = vrot.lane.b32.xlu0 %v306, 90
      %v378 = vpop.permute.xlu0 %377
      %379 = vrot.lane.b32.xlu0 %v307, 90
      %v380 = vpop.permute.xlu0 %379
      %381 = vrot.lane.b32.xlu0 %v308, 90
      %v382 = vpop.permute.xlu0 %381
      %vm383 = vcmask 736256
      %v384 = vsel %vm383, %v378, %v380
      %v385 = vsel %vm383, %v380, %v382
      %v386 = vld [vmem:[%s2] sm:$0xff]
      %388 = vset.pattern.permute.xlu0 0
      %389 = vperm.xlu0 %388, %v386
      %v390 = vpop.permute.xlu0 %389
      %392 = vrot.lane.b32.xlu0 %v306, 111
      %v393 = vpop.permute.xlu0 %392
      %394 = vrot.lane.b32.xlu0 %v307, 111
      %v395 = vpop.permute.xlu0 %394
      %396 = vrot.lane.b32.xlu0 %v308, 111
      %v397 = vpop.permute.xlu0 %396
      %398 = vrot.lane.b32.xlu0 %v321, 111
      %v399 = vpop.permute.xlu0 %398
      %400 = vrot.lane.b32.xlu0 %v322, 111
      %v401 = vpop.permute.xlu0 %400
      %402 = vrot.lane.b32.xlu0 %v319, 111
      %v403 = vpop.permute.xlu0 %402
      %404 = vrot.lane.b32.xlu0 %v330, 111
      %v405 = vpop.permute.xlu0 %404
      %406 = vrot.lane.b32.xlu0 %v331, 111
      %v407 = vpop.permute.xlu0 %406
      %408 = vrot.lane.b32.xlu0 %v328, 111
      %v409 = vpop.permute.xlu0 %408
      %410 = vrot.lane.b32.xlu0 %v339, 111
      %v411 = vpop.permute.xlu0 %410
      %412 = vrot.lane.b32.xlu0 %v340, 111
      %v413 = vpop.permute.xlu0 %412
      %414 = vrot.lane.b32.xlu0 %v337, 111
      %v415 = vpop.permute.xlu0 %414
      %416 = vrot.lane.b32.xlu0 %v348, 111
      %v417 = vpop.permute.xlu0 %416
      %418 = vrot.lane.b32.xlu0 %v349, 111
      %v419 = vpop.permute.xlu0 %418
      %420 = vrot.lane.b32.xlu0 %v346, 111
      %v421 = vpop.permute.xlu0 %420
      %422 = vrot.lane.b32.xlu0 %v357, 111
      %v423 = vpop.permute.xlu0 %422
      %424 = vrot.lane.b32.xlu0 %v358, 111
      %v425 = vpop.permute.xlu0 %424
      %426 = vrot.lane.b32.xlu0 %v355, 111
      %v427 = vpop.permute.xlu0 %426
      %428 = vrot.lane.b32.xlu0 %v366, 111
      %v429 = vpop.permute.xlu0 %428
      %430 = vrot.lane.b32.xlu0 %v367, 111
      %v431 = vpop.permute.xlu0 %430
      %432 = vrot.lane.b32.xlu0 %v364, 111
      %v433 = vpop.permute.xlu0 %432
      %434 = vrot.lane.b32.xlu0 %v375, 111
      %v435 = vpop.permute.xlu0 %434
      %436 = vrot.lane.b32.xlu0 %v376, 111
      %v437 = vpop.permute.xlu0 %436
      %438 = vrot.lane.b32.xlu0 %v373, 111
      %v439 = vpop.permute.xlu0 %438
      %440 = vrot.lane.b32.xlu0 %v384, 111
      %v441 = vpop.permute.xlu0 %440
      %442 = vrot.lane.b32.xlu0 %v385, 111
      %v443 = vpop.permute.xlu0 %442
      %444 = vrot.lane.b32.xlu0 %v382, 111
      %v445 = vpop.permute.xlu0 %444
      %vm446 = vcmask 908288
      %v447 = vsel %vm446, %v393, %v395
      %v448 = vsel %vm446, %v395, %v397
      %v449 = vsel %vm446, %v399, %v401
      %v450 = vsel %vm446, %v401, %v403
      %v451 = vsel %vm446, %v405, %v407
      %v452 = vsel %vm446, %v407, %v409
      %v453 = vsel %vm446, %v411, %v413
      %v454 = vsel %vm446, %v413, %v415
      %v455 = vsel %vm446, %v417, %v419
      %v456 = vsel %vm446, %v419, %v421
      %v457 = vsel %vm446, %v423, %v425
      %v458 = vsel %vm446, %v425, %v427
      %v459 = vsel %vm446, %v429, %v431
      %v460 = vsel %vm446, %v431, %v433
      %v461 = vsel %vm446, %v435, %v437
      %v462 = vsel %vm446, %v437, %v439
      %v463 = vsel %vm446, %v441, %v443
      %v464 = vsel %vm446, %v443, %v445
      %vm492 = vcmask 588800
      %v494 = vsel %vm492, %v310, 0
      %496 = vmatpush.msra.mxu0 0.0
      %497 = vmatpush.msra.mxu0 0.0
      %498 = vmatpush.msra.mxu0 0.0
      %499 = vmatpush.msra.mxu0 0.0
      %500 = vmatpush.msra.mxu0 0.0
      %501 = vmatpush.msra.mxu0 0.0
      %502 = vmatpush.msra.mxu0 0.0
      %503 = vmatpush.msra.mxu0 %v463
      %504 = vmatpush.msra.mxu0 %v461
      %505 = vmatpush.msra.mxu0 %v459
      %506 = vmatpush.msra.mxu0 %v457
      %507 = vmatpush.msra.mxu0 %v455
      %508 = vmatpush.msra.mxu0 %v453
      %509 = vmatpush.msra.mxu0 %v451
      %510 = vmatpush.msra.mxu0 %v449
      %511 = vmatpush.msra.mxu0 %v447
      %512 = vmatmul.f32.gmra.mxu0 %v494
      %v513 = vpop.f32.mrf.mxu0
      %v514 = vadd.f32 %v390, %v513
      %515 = vdwg.mxu0
      %516 = vmatpush.msra.mxu0 0.0
      %517 = vmatpush.msra.mxu0 0.0
      %518 = vmatpush.msra.mxu0 0.0
      %519 = vmatpush.msra.mxu0 0.0
      %520 = vmatpush.msra.mxu0 0.0
      %521 = vmatpush.msra.mxu0 0.0
      %522 = vmatpush.msra.mxu0 0.0
      %523 = vmatpush.msra.mxu0 %v464
      %524 = vmatpush.msra.mxu0 %v462
      %525 = vmatpush.msra.mxu0 %v460
      %526 = vmatpush.msra.mxu0 %v458
      %527 = vmatpush.msra.mxu0 %v456
      %528 = vmatpush.msra.mxu0 %v454
      %529 = vmatpush.msra.mxu0 %v452
      %530 = vmatpush.msra.mxu0 %v450
      %531 = vmatpush.msra.mxu0 %v448
      %532 = vmatmul.f32.gmra.mxu0 %v494
      %v533 = vpop.f32.mrf.mxu0
      %v534 = vadd.f32 %v390, %v533
      %535 = vdwg.mxu0
      %536 = vmatpush.msra.mxu0 0.0
      %537 = vmatpush.msra.mxu0 0.0
      %538 = vmatpush.msra.mxu0 0.0
      %539 = vmatpush.msra.mxu0 0.0
      %540 = vmatpush.msra.mxu0 0.0
      %541 = vmatpush.msra.mxu0 0.0
      %542 = vmatpush.msra.mxu0 0.0
      %543 = vmatpush.msra.mxu0 %v445
      %544 = vmatpush.msra.mxu0 %v439
      %545 = vmatpush.msra.mxu0 %v433
      %546 = vmatpush.msra.mxu0 %v427
      %547 = vmatpush.msra.mxu0 %v421
      %548 = vmatpush.msra.mxu0 %v415
      %549 = vmatpush.msra.mxu0 %v409
      %550 = vmatpush.msra.mxu0 %v403
      %551 = vmatpush.msra.mxu0 %v397
      %552 = vmatmul.f32.gmra.mxu0 %v494
      %v553 = vpop.f32.mrf.mxu0
      %v554 = vadd.f32 %v390, %v553
      %555 = vdwg.mxu0
      %v556 = vmax.f32 %v514, 0.0
      %v557 = vmax.f32 %v534, 0.0
      %v558 = vmax.f32 %v554, 0.0
      %v559 = vld [vmem:[%s3] sm:$0xf]
      %vm560 = vcmask 64512
      %v562 = vsel %vm560, %v559, 0
      %564 = vmatpush.msra.mxu0 0.0
      %565 = vmatpush.msra.mxu0 0.0
      %566 = vmatpush.msra.mxu0 0.0
      %567 = vmatpush.msra.mxu0 0.0
      %568 = vmatpush.msra.mxu0 0.0
      %569 = vmatpush.msra.mxu0 0.0
      %570 = vmatpush.msra.mxu0 0.0
      %571 = vmatpush.msra.mxu0 0.0
      %572 = vmatpush.msra.mxu0 0.0
      %573 = vmatpush.msra.mxu0 0.0
      %574 = vmatpush.msra.mxu0 0.0
      %575 = vmatpush.msra.mxu0 0.0
      %576 = vmatpush.msra.mxu0 0.0
      %577 = vmatpush.msra.mxu0 0.0
      %578 = vmatpush.msra.mxu0 0.0
      %579 = vmatpush.msra.mxu0 %v556
      %580 = vmatmul.f32.gmra.mxu0 %v562
      %v581 = vpop.f32.mrf.mxu0
      %v582 = vadd.f32 0.0, %v581
      %583 = vdwg.mxu0
      %584 = vmatpush.msra.mxu0 0.0
      %585 = vmatpush.msra.mxu0 0.0
      %586 = vmatpush.msra.mxu0 0.0
      %587 = vmatpush.msra.mxu0 0.0
      %588 = vmatpush.msra.mxu0 0.0
      %589 = vmatpush.msra.mxu0 0.0
      %590 = vmatpush.msra.mxu0 0.0
      %591 = vmatpush.msra.mxu0 0.0
      %592 = vmatpush.msra.mxu0 0.0
      %593 = vmatpush.msra.mxu0 0.0
      %594 = vmatpush.msra.mxu0 0.0
      %595 = vmatpush.msra.mxu0 0.0
      %596 = vmatpush.msra.mxu0 0.0
      %597 = vmatpush.msra.mxu0 0.0
      %598 = vmatpush.msra.mxu0 0.0
      %599 = vmatpush.msra.mxu0 %v557
      %600 = vmatmul.f32.gmra.mxu0 %v562
      %v601 = vpop.f32.mrf.mxu0
      %v602 = vadd.f32 0.0, %v601
      %603 = vdwg.mxu0
      %604 = vmatpush.msra.mxu0 0.0
      %605 = vmatpush.msra.mxu0 0.0
      %606 = vmatpush.msra.mxu0 0.0
      %607 = vmatpush.msra.mxu0 0.0
      %608 = vmatpush.msra.mxu0 0.0
      %609 = vmatpush.msra.mxu0 0.0
      %610 = vmatpush.msra.mxu0 0.0
      %611 = vmatpush.msra.mxu0 0.0
      %612 = vmatpush.msra.mxu0 0.0
      %613 = vmatpush.msra.mxu0 0.0
      %614 = vmatpush.msra.mxu0 0.0
      %615 = vmatpush.msra.mxu0 0.0
      %616 = vmatpush.msra.mxu0 0.0
      %617 = vmatpush.msra.mxu0 0.0
      %618 = vmatpush.msra.mxu0 0.0
      %619 = vmatpush.msra.mxu0 %v558
      %620 = vmatmul.f32.gmra.mxu0 %v562
      %v621 = vpop.f32.mrf.mxu0
      %v622 = vadd.f32 0.0, %v621
      %623 = vdwg.mxu0
      %v625 = vperm.slane %v309, 0
      %v626 = vperm.slane %v309, 1
      %v627 = vperm.slane %v309, 2
      %v631 = vmul.f32 %v582, %v625
      %v632 = vmul.f32 %v602, %v626
      %v633 = vmul.f32 %v622, %v627
      %637 = vrot.lane.b32.xlu0 %v631, 36
      %v638 = vpop.permute.xlu0 %637
      %639 = vrot.lane.b32.xlu0 %v632, 36
      %v640 = vpop.permute.xlu0 %639
      %641 = vrot.lane.b32.xlu0 %v633, 36
      %v642 = vpop.permute.xlu0 %641
      %vm643 = vcmask 293888
      %v644 = vsel %vm643, %v638, %v640
      %v645 = vsel %vm643, %v640, %v642
      %v649 = vsel %vm643, 0.0, %v638
      %v650 = vld [vmem:[%s4] sm:$0xff]
      %v652 = vrot.slane %v649, 4
      %v653 = vrot.slane %v644, 4
      %v654 = vrot.slane %v645, 4
      %655 = vrot.lane.b32.xlu0 %v652, 127
      %v656 = vpop.permute.xlu0 %655
      %657 = vrot.lane.b32.xlu0 %v653, 127
      %v658 = vpop.permute.xlu0 %657
      %659 = vrot.lane.b32.xlu0 %v654, 127
      %v660 = vpop.permute.xlu0 %659
      %v661 = vsel %vm320, %v656, %v658
      %v662 = vsel %vm320, %v658, %v660
      %666 = vrot.lane.b32.xlu0 %v649, 110
      %v667 = vpop.permute.xlu0 %666
      %668 = vrot.lane.b32.xlu0 %v644, 110
      %v669 = vpop.permute.xlu0 %668
      %670 = vrot.lane.b32.xlu0 %v645, 110
      %v671 = vpop.permute.xlu0 %670
      %v672 = vsel %vm338, %v667, %v669
      %v673 = vsel %vm338, %v669, %v671
      %677 = vrot.lane.b32.xlu0 %v652, 109
      %v678 = vpop.permute.xlu0 %677
      %679 = vrot.lane.b32.xlu0 %v653, 109
      %v680 = vpop.permute.xlu0 %679
      %681 = vrot.lane.b32.xlu0 %v654, 109
      %v682 = vpop.permute.xlu0 %681
      %v683 = vsel %vm347, %v678, %v680
      %v684 = vsel %vm347, %v680, %v682
      %vm688 = vcmask 1043456
      %v689 = vsel %vm688, %v649, %v661
      %v690 = vsel %vm688, %v644, %v662
      %v691 = vsel %vm688, %v645, %v660
      %v692 = vsel %vm688, %v672, %v683
      %v693 = vsel %vm688, %v673, %v684
      %v694 = vsel %vm688, %v671, %v682
      %701 = vrot.lane.b32.xlu0 %v689, 111
      %v702 = vpop.permute.xlu0 %701
      %703 = vrot.lane.b32.xlu0 %v690, 111
      %v704 = vpop.permute.xlu0 %703
      %705 = vrot.lane.b32.xlu0 %v691, 111
      %v706 = vpop.permute.xlu0 %705
      %707 = vrot.lane.b32.xlu0 %v692, 111
      %v708 = vpop.permute.xlu0 %707
      %709 = vrot.lane.b32.xlu0 %v693, 111
      %v710 = vpop.permute.xlu0 %709
      %711 = vrot.lane.b32.xlu0 %v694, 111
      %v712 = vpop.permute.xlu0 %711
      %v713 = vsel %vm446, %v702, %v704
      %v714 = vsel %vm446, %v704, %v706
      %v715 = vsel %vm446, %v708, %v710
      %v716 = vsel %vm446, %v710, %v712
      %vm723 = vcmask 130048
      %v725 = vsel %vm723, %v650, 0
      %727 = vmatpush.msra.mxu0 0.0
      %728 = vmatpush.msra.mxu0 0.0
      %729 = vmatpush.msra.mxu0 0.0
      %730 = vmatpush.msra.mxu0 0.0
      %731 = vmatpush.msra.mxu0 0.0
      %732 = vmatpush.msra.mxu0 0.0
      %733 = vmatpush.msra.mxu0 0.0
      %734 = vmatpush.msra.mxu0 0.0
      %735 = vmatpush.msra.mxu0 0.0
      %736 = vmatpush.msra.mxu0 0.0
      %737 = vmatpush.msra.mxu0 0.0
      %738 = vmatpush.msra.mxu0 0.0
      %739 = vmatpush.msra.mxu0 0.0
      %740 = vmatpush.msra.mxu0 0.0
      %741 = vmatpush.msra.mxu0 %v715
      %742 = vmatpush.msra.mxu0 %v713
      %743 = vmatmul.f32.gmra.mxu0 %v725
      %v744 = vpop.f32.mrf.mxu0
      %v745 = vadd.f32 0.0, %v744
      %746 = vdwg.mxu0
      %747 = vmatpush.msra.mxu0 0.0
      %748 = vmatpush.msra.mxu0 0.0
      %749 = vmatpush.msra.mxu0 0.0
      %750 = vmatpush.msra.mxu0 0.0
      %751 = vmatpush.msra.mxu0 0.0
      %752 = vmatpush.msra.mxu0 0.0
      %753 = vmatpush.msra.mxu0 0.0
      %754 = vmatpush.msra.mxu0 0.0
      %755 = vmatpush.msra.mxu0 0.0
      %756 = vmatpush.msra.mxu0 0.0
      %757 = vmatpush.msra.mxu0 0.0
      %758 = vmatpush.msra.mxu0 0.0
      %759 = vmatpush.msra.mxu0 0.0
      %760 = vmatpush.msra.mxu0 0.0
      %761 = vmatpush.msra.mxu0 %v716
      %762 = vmatpush.msra.mxu0 %v714
      %763 = vmatmul.f32.gmra.mxu0 %v725
      %v764 = vpop.f32.mrf.mxu0
      %v765 = vadd.f32 0.0, %v764
      %766 = vdwg.mxu0
      %767 = vmatpush.msra.mxu0 0.0
      %768 = vmatpush.msra.mxu0 0.0
      %769 = vmatpush.msra.mxu0 0.0
      %770 = vmatpush.msra.mxu0 0.0
      %771 = vmatpush.msra.mxu0 0.0
      %772 = vmatpush.msra.mxu0 0.0
      %773 = vmatpush.msra.mxu0 0.0
      %774 = vmatpush.msra.mxu0 0.0
      %775 = vmatpush.msra.mxu0 0.0
      %776 = vmatpush.msra.mxu0 0.0
      %777 = vmatpush.msra.mxu0 0.0
      %778 = vmatpush.msra.mxu0 0.0
      %779 = vmatpush.msra.mxu0 0.0
      %780 = vmatpush.msra.mxu0 0.0
      %781 = vmatpush.msra.mxu0 %v712
      %782 = vmatpush.msra.mxu0 %v706
      %783 = vmatmul.f32.gmra.mxu0 %v725
      %v784 = vpop.f32.mrf.mxu0
      %v785 = vadd.f32 0.0, %v784
      %786 = vdwg.mxu0
      %v787 = vmax.f32 %v745, 0.0
      %v788 = vmax.f32 %v765, 0.0
      %v789 = vmax.f32 %v785, 0.0
      %v790 = vmul.f32 %v787, %v625
      %v791 = vmul.f32 %v788, %v626
      %v792 = vmul.f32 %v789, %v627
      %796 = vrot.lane.b32.xlu0 %v790, 36
      %v797 = vpop.permute.xlu0 %796
      %798 = vrot.lane.b32.xlu0 %v791, 36
      %v799 = vpop.permute.xlu0 %798
      %800 = vrot.lane.b32.xlu0 %v792, 36
      %v801 = vpop.permute.xlu0 %800
      %v802 = vsel %vm643, %v797, %v799
      %v803 = vsel %vm643, %v799, %v801
      %v806 = vsel %vm643, 0.0, %v797
      %vm807 = vcmask 556032
      %v808 = vsel %vm807, %v803, 0.0
      %v809 = vld [vmem:[%s5] sm:$0xff]
      %812 = vrot.lane.b32.xlu0 %v806, 127
      %v813 = vpop.permute.xlu0 %812
      %814 = vrot.lane.b32.xlu0 %v802, 127
      %v815 = vpop.permute.xlu0 %814
      %816 = vrot.lane.b32.xlu0 %v808, 127
      %v817 = vpop.permute.xlu0 %816
      %v818 = vsel %vm320, %v813, %v815
      %v819 = vsel %vm320, %v815, %v817
      %820 = vrot.lane.b32.xlu0 %v806, 126
      %v821 = vpop.permute.xlu0 %820
      %822 = vrot.lane.b32.xlu0 %v802, 126
      %v823 = vpop.permute.xlu0 %822
      %824 = vrot.lane.b32.xlu0 %v808, 126
      %v825 = vpop.permute.xlu0 %824
      %v826 = vsel %vm329, %v821, %v823
      %v827 = vsel %vm329, %v823, %v825
      %828 = vrot.lane.b32.xlu0 %v806, 110
      %v829 = vpop.permute.xlu0 %828
      %830 = vrot.lane.b32.xlu0 %v802, 110
      %v831 = vpop.permute.xlu0 %830
      %832 = vrot.lane.b32.xlu0 %v808, 110
      %v833 = vpop.permute.xlu0 %832
      %v834 = vsel %vm338, %v829, %v831
      %v835 = vsel %vm338, %v831, %v833
      %836 = vrot.lane.b32.xlu0 %v806, 109
      %v837 = vpop.permute.xlu0 %836
      %838 = vrot.lane.b32.xlu0 %v802, 109
      %v839 = vpop.permute.xlu0 %838
      %840 = vrot.lane.b32.xlu0 %v808, 109
      %v841 = vpop.permute.xlu0 %840
      %v842 = vsel %vm347, %v837, %v839
      %v843 = vsel %vm347, %v839, %v841
      %844 = vrot.lane.b32.xlu0 %v806, 108
      %v845 = vpop.permute.xlu0 %844
      %846 = vrot.lane.b32.xlu0 %v802, 108
      %v847 = vpop.permute.xlu0 %846
      %848 = vrot.lane.b32.xlu0 %v808, 108
      %v849 = vpop.permute.xlu0 %848
      %v850 = vsel %vm356, %v845, %v847
      %v851 = vsel %vm356, %v847, %v849
      %852 = vrot.lane.b32.xlu0 %v806, 92
      %v853 = vpop.permute.xlu0 %852
      %854 = vrot.lane.b32.xlu0 %v802, 92
      %v855 = vpop.permute.xlu0 %854
      %856 = vrot.lane.b32.xlu0 %v808, 92
      %v857 = vpop.permute.xlu0 %856
      %v858 = vsel %vm365, %v853, %v855
      %v859 = vsel %vm365, %v855, %v857
      %860 = vrot.lane.b32.xlu0 %v806, 91
      %v861 = vpop.permute.xlu0 %860
      %862 = vrot.lane.b32.xlu0 %v802, 91
      %v863 = vpop.permute.xlu0 %862
      %864 = vrot.lane.b32.xlu0 %v808, 91
      %v865 = vpop.permute.xlu0 %864
      %v866 = vsel %vm374, %v861, %v863
      %v867 = vsel %vm374, %v863, %v865
      %868 = vrot.lane.b32.xlu0 %v806, 90
      %v869 = vpop.permute.xlu0 %868
      %870 = vrot.lane.b32.xlu0 %v802, 90
      %v871 = vpop.permute.xlu0 %870
      %872 = vrot.lane.b32.xlu0 %v808, 90
      %v873 = vpop.permute.xlu0 %872
      %v874 = vsel %vm383, %v869, %v871
      %v875 = vsel %vm383, %v871, %v873
      %v876 = vld [vmem:[%s6] sm:$0xff]
      %878 = vset.pattern.permute.xlu0 0
      %879 = vperm.xlu0 %878, %v876
      %v880 = vpop.permute.xlu0 %879
      %882 = vrot.lane.b32.xlu0 %v806, 111
      %v883 = vpop.permute.xlu0 %882
      %884 = vrot.lane.b32.xlu0 %v802, 111
      %v885 = vpop.permute.xlu0 %884
      %886 = vrot.lane.b32.xlu0 %v808, 111
      %v887 = vpop.permute.xlu0 %886
      %888 = vrot.lane.b32.xlu0 %v818, 111
      %v889 = vpop.permute.xlu0 %888
      %890 = vrot.lane.b32.xlu0 %v819, 111
      %v891 = vpop.permute.xlu0 %890
      %892 = vrot.lane.b32.xlu0 %v817, 111
      %v893 = vpop.permute.xlu0 %892
      %894 = vrot.lane.b32.xlu0 %v826, 111
      %v895 = vpop.permute.xlu0 %894
      %896 = vrot.lane.b32.xlu0 %v827, 111
      %v897 = vpop.permute.xlu0 %896
      %898 = vrot.lane.b32.xlu0 %v825, 111
      %v899 = vpop.permute.xlu0 %898
      %900 = vrot.lane.b32.xlu0 %v834, 111
      %v901 = vpop.permute.xlu0 %900
      %902 = vrot.lane.b32.xlu0 %v835, 111
      %v903 = vpop.permute.xlu0 %902
      %904 = vrot.lane.b32.xlu0 %v833, 111
      %v905 = vpop.permute.xlu0 %904
      %906 = vrot.lane.b32.xlu0 %v842, 111
      %v907 = vpop.permute.xlu0 %906
      %908 = vrot.lane.b32.xlu0 %v843, 111
      %v909 = vpop.permute.xlu0 %908
      %910 = vrot.lane.b32.xlu0 %v841, 111
      %v911 = vpop.permute.xlu0 %910
      %912 = vrot.lane.b32.xlu0 %v850, 111
      %v913 = vpop.permute.xlu0 %912
      %914 = vrot.lane.b32.xlu0 %v851, 111
      %v915 = vpop.permute.xlu0 %914
      %916 = vrot.lane.b32.xlu0 %v849, 111
      %v917 = vpop.permute.xlu0 %916
      %918 = vrot.lane.b32.xlu0 %v858, 111
      %v919 = vpop.permute.xlu0 %918
      %920 = vrot.lane.b32.xlu0 %v859, 111
      %v921 = vpop.permute.xlu0 %920
      %922 = vrot.lane.b32.xlu0 %v857, 111
      %v923 = vpop.permute.xlu0 %922
      %924 = vrot.lane.b32.xlu0 %v866, 111
      %v925 = vpop.permute.xlu0 %924
      %926 = vrot.lane.b32.xlu0 %v867, 111
      %v927 = vpop.permute.xlu0 %926
      %928 = vrot.lane.b32.xlu0 %v865, 111
      %v929 = vpop.permute.xlu0 %928
      %930 = vrot.lane.b32.xlu0 %v874, 111
      %v931 = vpop.permute.xlu0 %930
      %932 = vrot.lane.b32.xlu0 %v875, 111
      %v933 = vpop.permute.xlu0 %932
      %934 = vrot.lane.b32.xlu0 %v873, 111
      %v935 = vpop.permute.xlu0 %934
      %v936 = vsel %vm446, %v883, %v885
      %v937 = vsel %vm446, %v885, %v887
      %v938 = vsel %vm446, %v889, %v891
      %v939 = vsel %vm446, %v891, %v893
      %v940 = vsel %vm446, %v895, %v897
      %v941 = vsel %vm446, %v897, %v899
      %v942 = vsel %vm446, %v901, %v903
      %v943 = vsel %vm446, %v903, %v905
      %v944 = vsel %vm446, %v907, %v909
      %v945 = vsel %vm446, %v909, %v911
      %v946 = vsel %vm446, %v913, %v915
      %v947 = vsel %vm446, %v915, %v917
      %v948 = vsel %vm446, %v919, %v921
      %v949 = vsel %vm446, %v921, %v923
      %v950 = vsel %vm446, %v925, %v927
      %v951 = vsel %vm446, %v927, %v929
      %v952 = vsel %vm446, %v931, %v933
      %v953 = vsel %vm446, %v933, %v935
      %v982 = vsel %vm492, %v809, 0
      %984 = vmatpush.msra.mxu0 0.0
      %985 = vmatpush.msra.mxu0 0.0
      %986 = vmatpush.msra.mxu0 0.0
      %987 = vmatpush.msra.mxu0 0.0
      %988 = vmatpush.msra.mxu0 0.0
      %989 = vmatpush.msra.mxu0 0.0
      %990 = vmatpush.msra.mxu0 0.0
      %991 = vmatpush.msra.mxu0 %v952
      %992 = vmatpush.msra.mxu0 %v950
      %993 = vmatpush.msra.mxu0 %v948
      %994 = vmatpush.msra.mxu0 %v946
      %995 = vmatpush.msra.mxu0 %v944
      %996 = vmatpush.msra.mxu0 %v942
      %997 = vmatpush.msra.mxu0 %v940
      %998 = vmatpush.msra.mxu0 %v938
      %999 = vmatpush.msra.mxu0 %v936
      %1000 = vmatmul.f32.gmra.mxu0 %v982
      %v1001 = vpop.f32.mrf.mxu0
      %v1002 = vadd.f32 %v880, %v1001
      %1003 = vdwg.mxu0
      %1004 = vmatpush.msra.mxu0 0.0
      %1005 = vmatpush.msra.mxu0 0.0
      %1006 = vmatpush.msra.mxu0 0.0
      %1007 = vmatpush.msra.mxu0 0.0
      %1008 = vmatpush.msra.mxu0 0.0
      %1009 = vmatpush.msra.mxu0 0.0
      %1010 = vmatpush.msra.mxu0 0.0
      %1011 = vmatpush.msra.mxu0 %v953
      %1012 = vmatpush.msra.mxu0 %v951
      %1013 = vmatpush.msra.mxu0 %v949
      %1014 = vmatpush.msra.mxu0 %v947
      %1015 = vmatpush.msra.mxu0 %v945
      %1016 = vmatpush.msra.mxu0 %v943
      %1017 = vmatpush.msra.mxu0 %v941
      %1018 = vmatpush.msra.mxu0 %v939
      %1019 = vmatpush.msra.mxu0 %v937
      %1020 = vmatmul.f32.gmra.mxu0 %v982
      %v1021 = vpop.f32.mrf.mxu0
      %v1022 = vadd.f32 %v880, %v1021
      %1023 = vdwg.mxu0
      %1024 = vmatpush.msra.mxu0 0.0
      %1025 = vmatpush.msra.mxu0 0.0
      %1026 = vmatpush.msra.mxu0 0.0
      %1027 = vmatpush.msra.mxu0 0.0
      %1028 = vmatpush.msra.mxu0 0.0
      %1029 = vmatpush.msra.mxu0 0.0
      %1030 = vmatpush.msra.mxu0 0.0
      %1031 = vmatpush.msra.mxu0 %v935
      %1032 = vmatpush.msra.mxu0 %v929
      %1033 = vmatpush.msra.mxu0 %v923
      %1034 = vmatpush.msra.mxu0 %v917
      %1035 = vmatpush.msra.mxu0 %v911
      %1036 = vmatpush.msra.mxu0 %v905
      %1037 = vmatpush.msra.mxu0 %v899
      %1038 = vmatpush.msra.mxu0 %v893
      %1039 = vmatpush.msra.mxu0 %v887
      %1040 = vmatmul.f32.gmra.mxu0 %v982
      %v1041 = vpop.f32.mrf.mxu0
      %v1042 = vadd.f32 %v880, %v1041
      %1043 = vdwg.mxu0
      %v1047 = vadd.f32 %v1002, %v366
      %v1048 = vadd.f32 %v1022, %v367
      %v1049 = vadd.f32 %v1042, %v364
      %v1050 = vmax.f32 %v1047, 0.0
      %v1051 = vmax.f32 %v1048, 0.0
      %v1052 = vmax.f32 %v1049, 0.0
      %1053 = vst [vmem:[%s305] sm:$0xff] %v1050
      %1054 = vst [vmem:[%s305 + $0x8] sm:$0xff] %v1051
      %vm1055 = vcmask 261120
      %1056 = vst.msk [vmem:[%s305 + $0x10] sm:$0xff] %vm1055, %v1052
      %p1057 = scmp.lt.s32.totalorder %s19, 1
      %s1058 = scalar_select %p1057, %s19, 1
      %s1059 = smul.addr %s1058, 3
      %s1060 = smul.addr %s1059, 8
      %s1061 = scalar_lea.vmem %s8, %s1060
      // Predicated region
      $region53: #{basic_block_forward.1} parent=51 // pred_check
        %p1062 = pneg %p210
      $region54: #{basic_block_forward.1} parent=51 // pred_check_branch
        %1064 = sbr.rel (%p1062) target = $region56
      $region55: #{basic_block_forward.1} parent=51 // pred_region
        _
      $region56: #{basic_block_forward.1} parent=51 // pred_fallthru
        _
    $region52: #{basic_block_forward.1} parent=5 // pred_fallthru
      _
    %p1065 = scmp.le.s32.totalorder 2, %s14
    // Predicated region
    $region57: #{basic_block_forward.1} parent=5 // pred_check
      %p1066 = pneg %p1065
    $region58: #{basic_block_forward.1} parent=5 // pred_check_branch
      %1068 = sbr.rel (%p1066) target = $region60
    $region59: #{basic_block_forward.1} parent=5 // pred_region
      %s1069 = ssub.s32 %s14, 2
      // Predicated region
      $region61: #{basic_block_forward.1} parent=59 // pred_check
        %p1070 = pneg %p216
      $region62: #{basic_block_forward.1} parent=59 // pred_check_branch
        %1072 = sbr.rel (%p1070) target = $region64
      $region63: #{basic_block_forward.1} parent=59 // pred_region
        %p1073 = scmp.lt.s32.totalorder %s20, 1
        %s1074 = scalar_select %p1073, %s20, 1
        %s1075 = smul.addr %s1074, 3
        %s1076 = smul.addr %s1075, 8
        %s1077 = scalar_lea.vmem %s8, %s1076
      $region64: #{basic_block_forward.1} parent=59 // pred_fallthru
        _
    $region60: #{basic_block_forward.1} parent=5 // pred_fallthru
      _
  $region6: #{basic_block_forward.1} parent=0 // loop_footer
    %s18 = sadd.s32 1, %s14
  $region7: #{basic_block_forward.1} parent=0 // loop_footer_branch
    %13 = sbr.rel target = $region3
  $region8: #{basic_block_forward.1} parent=0 // loop_exit
    _

</llo_original>
